<compile_context>
chip_gen: v7x
topology: tpu7x:2x2x1
jax: 0.10.0
libtpu: 0.0.40
codegen_flags: <defaults>
</compile_context>

<pallas_src>
import math

import jax
import jax.numpy as jnp
from jax.experimental import pallas as pl
from jax.experimental.pallas import tpu as pltpu


# --------------------------------------------------------------------------- #
# Tiling helpers
# --------------------------------------------------------------------------- #
def _round_up(x, m):
    return ((x + m - 1) // m) * m


def _pick_tile(dim, cap, align):
    """Pick (tile, padded_dim).

    tile is a multiple of `align`, tile <= max(cap, align); padded_dim is a
    multiple of tile and >= dim.  Trades at most ~25% extra padding for fewer
    blocks (bigger tiles => fewer re-reads / grid steps).
    """
    dim_a = _round_up(max(int(dim), 1), align)
    cap = max(align, (min(int(cap), dim_a) // align) * align)

    candidates = []
    t = align
    while t <= cap:
        padded = _round_up(dim_a, t)
        candidates.append((padded // t, padded, -t))  # (n_blocks, padded, -tile)
        t += align

    min_padded = min(p for _, p, _ in candidates)
    allowed = min_padded + min_padded // 4
    feasible = [c for c in candidates if c[1] <= allowed]
    feasible.sort()  # fewest blocks, then least padding, then largest tile
    n_blocks, padded, neg_t = feasible[0]
    return -neg_t, padded


def _split_tile(padded, align):
    """Largest multiple of `align` that divides `padded` and gives >= 2 blocks."""
    best = align
    t = align
    while 2 * t <= padded:
        if padded % t == 0:
            best = t
        t += align
    return best


# --------------------------------------------------------------------------- #
# Kernels
# --------------------------------------------------------------------------- #
def _linear_single_kernel(x_ref, w_ref, b_ref, o_ref):
    """Whole problem in one VMEM tile: y = x @ w + b (f32, exact nn.Linear)."""
    acc = jnp.dot(x_ref[...], w_ref[...], preferred_element_type=jnp.float32)
    o_ref[...] = (acc + b_ref[...]).astype(o_ref.dtype)


def _linear_grid_kernel(x_ref, w_ref, b_ref, o_ref, acc_ref):
    """One (tm, tn) output tile, accumulating over the K grid axis.

    Bias is folded into the accumulator init (k == 0), so the epilogue is a
    plain cast + store.
    """
    k = pl.program_id(2)

    @pl.when(k == 0)
    def _():
        acc_ref[...] = jnp.broadcast_to(b_ref[...], acc_ref.shape)

    acc_ref[...] += jnp.dot(x_ref[...], w_ref[...],
                            preferred_element_type=jnp.float32)

    @pl.when(k == pl.num_programs(2) - 1)
    def _():
        o_ref[...] = acc_ref[...].astype(o_ref.dtype)


# --------------------------------------------------------------------------- #
# Module wrapper
# --------------------------------------------------------------------------- #
class RescaleNN:
    """Pallas-TPU equivalent of DDECC's Rescale_NN: y = x @ W.T + b."""

    def __init__(self, weight, bias, *, compute_dtype=jnp.bfloat16,
                 tm_cap=512, tn_cap=512, tk_cap=None):
        weight = jnp.asarray(weight)            # (output_dim, input_dim) torch layout
        bias = jnp.asarray(bias)                # (output_dim,)
        self.N, self.K = weight.shape
        assert bias.shape == (self.N,)

        self.compute_dtype = jnp.dtype(compute_dtype)
        csize = self.compute_dtype.itemsize
        if tk_cap is None:
            tk_cap = 2048 if csize <= 2 else 1024
        self.tm_cap = tm_cap
        self.m_align = 16 if csize <= 2 else 8   # bf16 sublane packing

        w_t = weight.T                                        # (K, N)
        b_row = bias.reshape(1, self.N).astype(jnp.float32)   # (1, N)

        # Fast single-tile path params: unpadded, original dtype (exact f32).
        self.w_fast = w_t
        self.b_fast = b_row

        # Tiled path: N / K tiling fixed at init; pad + cast the weight ONCE.
        self.tk, self.Kp = _pick_tile(self.K, tk_cap, 128)
        self.tn, self.Np = _pick_tile(self.N, tn_cap, 128)
        self.w_pad = jnp.pad(w_t.astype(self.compute_dtype),
                             ((0, self.Kp - self.K), (0, self.Np - self.N)))
        self.b_pad = jnp.pad(b_row, ((0, 0), (0, self.Np - self.N)))

    # ------------------------------------------------------------------ #
    def __call__(self, x):
        assert x.shape[-1] == self.K
        lead = x.shape[:-1]
        M = int(math.prod(lead)) if lead else 1
        x2 = x.reshape(M, self.K)

        # Tiny problems (DDECC's actual shapes): one VMEM tile, no pad/slice,
        # no grid -- wall time here is launch-overhead dominated, so the goal
        # is the minimum number of XLA ops around the pallas_call.
        if M <= 256 and self.K <= 1024 and self.N <= 1024:
            out = pl.pallas_call(
                _linear_single_kernel,
                out_shape=jax.ShapeDtypeStruct((M, self.N), x2.dtype),
            )(x2, self.w_fast, self.b_fast)
        else:
            out = self._forward_tiled(x2, M)

        return out.reshape(lead + (self.N,))

    # ------------------------------------------------------------------ #
    def _forward_tiled(self, x2, M):
        K, N, Kp, Np = self.K, self.N, self.Kp, self.Np
        tk, tn = self.tk, self.tn
        tm, Mp = _pick_tile(M, self.tm_cap, self.m_align)

        n_m, n_n, n_k = Mp // tm, Np // tn, Kp // tk
        # Guarantee >= 2 blocks along a "parallel" axis (dual-TC on v7x).
        if n_m * n_n == 1:
            if Np >= 2 * 128:
                tn = _split_tile(Np, 128)
                n_n = Np // tn
            elif Mp >= 2 * self.m_align:
                tm = _split_tile(Mp, self.m_align)
                n_m = Mp // tm

        # Cast x to the MXU-native dtype at the call boundary (halves x DMA),
        # then pad only if the aligned extents differ from the true ones.
        x_c = x2.astype(self.compute_dtype)
        if (Mp, Kp) != (M, K):
            x_c = jnp.pad(x_c, ((0, Mp - M), (0, Kp - K)))

        csize = self.compute_dtype.itemsize
        osize = jnp.dtype(x2.dtype).itemsize
        # Double-buffered input/output tiles + f32 accumulator (+ headroom),
        # clamped to 48 MiB so it leaves margin inside v7x's 64 MiB/TC VMEM.
        vmem_bytes = (2 * (tm * tk * csize + tk * tn * csize + tn * 4)
                      + 2 * tm * tn * osize
                      + tm * tn * 4)
        vmem_limit = max(32 << 20, min(int(vmem_bytes * 1.5) + (4 << 20), 48 << 20))

        cost = pl.CostEstimate(
            flops=2 * Mp * Np * Kp,
            transcendentals=0,
            # x is streamed once per N-block, w once per M-block (re-reads).
            bytes_accessed=(csize * (Mp * Kp * n_n + Kp * Np * n_m)
                            + osize * Mp * Np + 4 * Np * n_m),
        )

        out_p = pl.pallas_call(
            _linear_grid_kernel,
            out_shape=jax.ShapeDtypeStruct((Mp, Np), x2.dtype),
            grid_spec=pltpu.PrefetchScalarGridSpec(
                num_scalar_prefetch=0,
                grid=(n_m, n_n, n_k),
                in_specs=[
                    pl.BlockSpec((tm, tk), lambda i, j, k: (i, k)),
                    pl.BlockSpec((tk, tn), lambda i, j, k: (k, j)),
                    pl.BlockSpec((1, tn), lambda i, j, k: (0, j)),
                ],
                out_specs=pl.BlockSpec((tm, tn), lambda i, j, k: (i, j)),
                scratch_shapes=[pltpu.VMEM((tm, tn), jnp.float32)],
            ),
            compiler_params=pltpu.CompilerParams(
                dimension_semantics=("parallel", "parallel", "arbitrary"),
                vmem_limit_bytes=vmem_limit,
            ),
            cost_estimate=cost,
        )(x_c, self.w_pad, self.b_pad)

        if (Mp, Np) != (M, N):
            out_p = out_p[:M, :N]
        return out_p


# --------------------------------------------------------------------------- #
# Self-test
# --------------------------------------------------------------------------- #
if __name__ == "__main__":
    key = jax.random.PRNGKey(0)

    # ---- Case 1: the module's actual shapes (fast single-tile path, f32) ----
    batch, input_dim, output_dim = 8, 32, 64
    kx, kw, kb, key = jax.random.split(key, 4)
    bound = 1.0 / math.sqrt(input_dim)               # torch nn.Linear init bound
    w1 = jax.random.uniform(kw, (output_dim, input_dim), jnp.float32, -bound, bound)
    b1 = jax.random.uniform(kb, (output_dim,), jnp.float32, -bound, bound)
    x1 = jax.random.normal(kx, (batch, input_dim), jnp.float32)

    m1 = RescaleNN(w1, b1)
    y1 = jax.block_until_ready(m1(x1))
    y1_ref = x1 @ w1.T + b1
    assert y1.shape == (batch, output_dim)
    assert jnp.allclose(y1, y1_ref, atol=1e-4, rtol=1e-4), "fast path mismatch"

    # ---- Case 2: grid path, single K step, parallel split of N (bf16 MXU) ---
    M2, K2, N2 = 384, 512, 384
    kx, kw, kb, key = jax.random.split(key, 4)
    bound = 1.0 / math.sqrt(K2)
    w2 = jax.random.uniform(kw, (N2, K2), jnp.float32, -bound, bound)
    b2 = jax.random.uniform(kb, (N2,), jnp.float32, -bound, bound)
    x2 = jax.random.normal(kx, (M2, K2), jnp.float32)

    m2 = RescaleNN(w2, b2)
    y2 = jax.block_until_ready(m2(x2))
    y2_ref = x2 @ w2.T + b2
    assert y2.shape == (M2, N2)
    assert jnp.allclose(y2, y2_ref, atol=3e-2, rtol=3e-2), "grid path mismatch"

    # ---- Case 3: awkward dims, multi-block grid with 2 K steps (bf16) -------
    M3, K3, N3 = 520, 2560, 896
    kx, kw, kb, key = jax.random.split(key, 4)
    bound = 1.0 / math.sqrt(K3)
    w3 = jax.random.uniform(kw, (N3, K3), jnp.float32, -bound, bound)
    b3 = jax.random.uniform(kb, (N3,), jnp.float32, -bound, bound)
    x3 = jax.random.normal(kx, (M3, K3), jnp.float32)

    m3 = RescaleNN(w3, b3)
    y3 = jax.block_until_ready(m3(x3))
    y3_ref = x3 @ w3.T + b3
    assert y3.shape == (M3, N3)
    assert jnp.allclose(y3, y3_ref, atol=3e-2, rtol=3e-2), "multi-K grid mismatch"

    print("KERNEL_OK")
</pallas_src>

<mosaic_0001>
module attributes {stable_mosaic.version = 11 : i64} {
  func.func @_linear_single_kernel(%arg0: memref<8x32xf32, #tpu.memory_space<vmem>>, %arg1: memref<32x64xf32, #tpu.memory_space<vmem>>, %arg2: memref<1x64xf32, #tpu.memory_space<vmem>>, %arg3: memref<8x64xf32, #tpu.memory_space<vmem>>) attributes {dimension_semantics = [], scalar_prefetch = 0 : i64, scratch_operands = 0 : i64, tpu.core_type = #tpu.core_type<tc>} {
    %c0 = arith.constant 0 : index
    %c0_0 = arith.constant 0 : index
    %0 = vector.load %arg0[%c0, %c0_0] : memref<8x32xf32, #tpu.memory_space<vmem>>, vector<8x32xf32>
    %c0_1 = arith.constant 0 : index
    %c0_2 = arith.constant 0 : index
    %1 = vector.load %arg1[%c0_1, %c0_2] : memref<32x64xf32, #tpu.memory_space<vmem>>, vector<32x64xf32>
    %cst = arith.constant dense<0.000000e+00> : vector<8x64xf32>
    %2 = tpu.matmul %0, %1, %cst {dimension_numbers = #tpu.dot_dimension_numbers<[1], [0], [0], [1], [0, 0, 1, 1], [], []>} : vector<8x32xf32>, vector<32x64xf32>, vector<8x64xf32> -> vector<8x64xf32>
    %c0_3 = arith.constant 0 : index
    %c0_4 = arith.constant 0 : index
    %3 = vector.load %arg2[%c0_3, %c0_4] : memref<1x64xf32, #tpu.memory_space<vmem>>, vector<1x64xf32>
    %4 = vector.broadcast %3 : vector<1x64xf32> to vector<8x64xf32>
    %5 = arith.addf %2, %4 : vector<8x64xf32>
    %c0_5 = arith.constant 0 : index
    %c0_6 = arith.constant 0 : index
    %6 = vector.load %arg3[%c0_5, %c0_6] : memref<8x64xf32, #tpu.memory_space<vmem>>, vector<8x64xf32>
    tpu.vector_store %arg3[%c0_5, %c0_6], %5 {strides = array<i32>} : memref<8x64xf32, #tpu.memory_space<vmem>>, vector<8x64xf32>,
    return
  }
}

</mosaic_0001>

<llo_original>
// kernel: tpu_custom_call.1
$region0: #{tpu_custom_call.1}
  #allocation0 [shape = 'u32[]', space=smem, size = 0x4, offset = 0x4, fixed_abs, tag = 'smem constant byte address 0x4 - core index']
  #allocation1 [shape = 'u32[144,128]{1,0:T(1,128)}', space=vmem, size = 0x12000, scoped, tag = 'internal scratch']
  %s0 = inlined_call_operand.hbm [shape: f32[8,32], index: 0, kind: input, shape index: {}]
  %s1 = inlined_call_operand.hbm [shape: f32[32,64], index: 1, kind: input, shape index: {}]
  %s2 = inlined_call_operand.vmem [shape: f32[1,64], index: 2, kind: input, shape index: {}]
  %s3 = inlined_call_operand.hbm [shape: f32[8,64], index: 3, kind: output, shape index: {}]
  %s4 = sld [smem:[#allocation0]]
  $region30: #{tpu_custom_call.1} parent=0
    _
  %s6 = ssub.s32 1, %s4
  %s7 = scalar_select 0, %s6, %s4
  $region1: #{tpu_custom_call.1} parent=0
    #allocation2 [shape = 'u8[4096]{0}', space=vmem, size = 0x1000, scoped, tag = 'input window, operand 0, single buffered']
    #allocation3 [shape = 's32[1]{0}', space=sflag, size = 0x4, scoped, tag = 'scoped memory for tpu_custom_call.1']
    #allocation4 [shape = 's32[1]{0}', space=sflag, size = 0x4, scoped, tag = 'scoped memory for tpu_custom_call.1']
    #allocation5 [shape = 'u8[16384]{0}', space=vmem, size = 0x4000, scoped, tag = 'input window, operand 1, single buffered']
    #allocation6 [shape = 's32[1]{0}', space=sflag, size = 0x4, scoped, tag = 'scoped memory for tpu_custom_call.1']
    #allocation7 [shape = 'u8[4096]{0}', space=vmem, size = 0x1000, scoped, tag = 'output window, operand 0, single buffered']
    %8 = vsyncpa [#allocation3], 0
    %9 = vsyncpa [#allocation6], 0
    %10 = vsyncpa [#allocation4], 0
    // Predicated region
    $region2: #{tpu_custom_call.1} parent=1 // pred_check
      _
    $region3: #{tpu_custom_call.1} parent=1 // pred_check_branch
      %12 = sbr.rel (0) target = $region5
    $region4: #{tpu_custom_call.1} parent=1 // pred_region
      %s14 = ssub.s32 128, 128
      %15 = vsyncadd [#allocation3], %s14
      %s17 = sshll.u32 [#allocation2], 4
      %s18 = int_to_ptr.vmem [resolvable:$true] %s17
      %20 = dma.hbm_to_vmem [thread:$0]  %s0, 128, %s18, [#allocation3]
    $region5: #{tpu_custom_call.1} parent=1 // pred_fallthru
      _
    // Predicated region
    $region6: #{tpu_custom_call.1} parent=1 // pred_check
      _
    $region7: #{tpu_custom_call.1} parent=1 // pred_check_branch
      %22 = sbr.rel (0) target = $region9
    $region8: #{tpu_custom_call.1} parent=1 // pred_region
      %s24 = ssub.s32 512, 512
      %25 = vsyncadd [#allocation6], %s24
      %s26 = sshll.u32 [#allocation5], 4
      %s27 = int_to_ptr.vmem [resolvable:$true] %s26
      %32 = dma.hbm_to_vmem [thread:$0]  %s1, 512, %s27, [#allocation6], 128, 128, 8
    $region9: #{tpu_custom_call.1} parent=1 // pred_fallthru
      _
    // Predicated region
    $region10: #{tpu_custom_call.1} parent=1 // pred_check
      _
    $region11: #{tpu_custom_call.1} parent=1 // pred_check_branch
      %34 = sbr.rel (0) target = $region13
    $region12: #{tpu_custom_call.1} parent=1 // pred_region
      _
    $region13: #{tpu_custom_call.1} parent=1 // pred_fallthru
      _
    // Predicated region
    $region14: #{tpu_custom_call.1} parent=1 // pred_check
      _
    $region15: #{tpu_custom_call.1} parent=1 // pred_check_branch
      %36 = sbr.rel (0) target = $region17
    $region16: #{tpu_custom_call.1} parent=1 // pred_region
      %37 = dma.done [#allocation3], 128
    $region17: #{tpu_custom_call.1} parent=1 // pred_fallthru
      _
    // Predicated region
    $region18: #{tpu_custom_call.1} parent=1 // pred_check
      _
    $region19: #{tpu_custom_call.1} parent=1 // pred_check_branch
      %39 = sbr.rel (0) target = $region21
    $region20: #{tpu_custom_call.1} parent=1 // pred_region
      %40 = dma.done [#allocation6], 512
    $region21: #{tpu_custom_call.1} parent=1 // pred_fallthru
      _
    %v41 = vld [vmem:[#allocation2] sm:$0xff]
    %v42 = vld [vmem:[#allocation5] sm:$0xff]
    %v43 = vld [vmem:[#allocation5 + $0x8] sm:$0xff]
    %v44 = vld [vmem:[#allocation5 + $0x10] sm:$0xff]
    %v45 = vld [vmem:[#allocation5 + $0x18] sm:$0xff]
    %v46 = vld [vmem:[%s2] sm:$0x1]
    %v48 = vlaneseq
    %v49 = vshrl.u32 %v48, 7
    %v50 = vsub.s32 0, %v49
    %v51 = vrot.slane %v46, %v50
    %vm53 = vcmask 261120
    %v55 = vsel %vm53, %v41, 0
    %57 = vmatprep.subr.mxu0 0.0
    %58 = vmatpush1.msra.mxu0 %v42
    %59 = vmatprep.subr.mxu0 0.0
    %60 = vmatpush1.msra.mxu0 %v43
    %61 = vmatprep.subr.mxu0 0.0
    %62 = vmatpush1.msra.mxu0 %v44
    %63 = vmatprep.subr.mxu0 0.0
    %64 = vmatpush1.msra.mxu0 %v45
    %65 = vmatprep.subr.mxu0 0.0
    %66 = vmatpush1.msra.mxu0 0.0
    %67 = vmatprep.subr.mxu0 0.0
    %68 = vmatpush1.msra.mxu0 0.0
    %69 = vmatprep.subr.mxu0 0.0
    %70 = vmatpush1.msra.mxu0 0.0
    %71 = vmatprep.subr.mxu0 0.0
    %72 = vmatpush1.msra.mxu0 0.0
    %73 = vmatprep.subr.mxu0 0.0
    %74 = vmatpush1.msra.mxu0 0.0
    %75 = vmatprep.subr.mxu0 0.0
    %76 = vmatpush1.msra.mxu0 0.0
    %77 = vmatprep.subr.mxu0 0.0
    %78 = vmatpush1.msra.mxu0 0.0
    %79 = vmatprep.subr.mxu0 0.0
    %80 = vmatpush1.msra.mxu0 0.0
    %81 = vmatprep.subr.mxu0 0.0
    %82 = vmatpush1.msra.mxu0 0.0
    %83 = vmatprep.subr.mxu0 0.0
    %84 = vmatpush1.msra.mxu0 0.0
    %85 = vmatprep.subr.mxu0 0.0
    %86 = vmatpush1.msra.mxu0 0.0
    %87 = vmatprep.subr.mxu0 0.0
    %88 = vmatpush1.msra.mxu0 0.0
    %89 = vmatprep.subr.mxu0 0.0
    %90 = vmatpush1.msra.mxu0 0.0
    %91 = vmatprep.subr.mxu0 0.0
    %92 = vmatpush1.msra.mxu0 0.0
    %93 = vmatprep.subr.mxu0 0.0
    %94 = vmatpush1.msra.mxu0 0.0
    %95 = vmatprep.subr.mxu0 0.0
    %96 = vmatpush1.msra.mxu0 0.0
    %97 = vmatprep.subr.mxu0 0.0
    %98 = vmatpush1.msra.mxu0 0.0
    %99 = vmatprep.subr.mxu0 0.0
    %100 = vmatpush1.msra.mxu0 0.0
    %101 = vmatprep.subr.mxu0 0.0
    %102 = vmatpush1.msra.mxu0 0.0
    %103 = vmatprep.subr.mxu0 0.0
    %104 = vmatpush1.msra.mxu0 0.0
    %105 = vmatprep.subr.mxu0 0.0
    %106 = vmatpush1.msra.mxu0 0.0
    %107 = vmatprep.subr.mxu0 0.0
    %108 = vmatpush1.msra.mxu0 0.0
    %109 = vmatprep.subr.mxu0 0.0
    %110 = vmatpush1.msra.mxu0 0.0
    %111 = vmatprep.subr.mxu0 0.0
    %112 = vmatpush1.msra.mxu0 0.0
    %113 = vmatprep.subr.mxu0 0.0
    %114 = vmatpush1.msra.mxu0 0.0
    %115 = vmatprep.subr.mxu0 0.0
    %116 = vmatpush1.msra.mxu0 0.0
    %117 = vmatprep.subr.mxu0 0.0
    %118 = vmatpush1.msra.mxu0 0.0
    %119 = vmatprep.subr.mxu0 0.0
    %120 = vmatpush1.msra.mxu0 0.0
    %121 = vmatprep.mubr.f32.mxu0 0.0
    %122 = vmatmul.mubr.f32.gmra.mrb[0].mxu0 %v55
    %v123 = vpop.f32.mrb[0].mxu0
    %v124 = vadd.f32 %v51, %v123
    %v125 = vpop.f32.mrb[0].mxu0
    %126 = vdwg.mxu0
    %vm127 = vcmask 523264
    %128 = vst.msk [vmem:[#allocation7] sm:$0xff] %vm127, %v124
    // Predicated region
    $region22: #{tpu_custom_call.1} parent=1 // pred_check
      _
    $region23: #{tpu_custom_call.1} parent=1 // pred_check_branch
      %130 = sbr.rel (0) target = $region25
    $region24: #{tpu_custom_call.1} parent=1 // pred_region
      %s132 = ssub.s32 128, 128
      %133 = vsyncadd [#allocation4], %s132
      %s135 = sshll.u32 [#allocation7], 4
      %s136 = int_to_ptr.vmem [resolvable:$true] %s135
      %138 = dma.vmem_to_hbm [thread:$0]  %s136, 128, %s3, [#allocation4]
    $region25: #{tpu_custom_call.1} parent=1 // pred_fallthru
      _
    // Predicated region
    $region26: #{tpu_custom_call.1} parent=1 // pred_check
      _
    $region27: #{tpu_custom_call.1} parent=1 // pred_check_branch
      %140 = sbr.rel (0) target = $region29
    $region28: #{tpu_custom_call.1} parent=1 // pred_region
      %141 = dma.done [#allocation4], 128
    $region29: #{tpu_custom_call.1} parent=1 // pred_fallthru
      _
    %142 = vsyncpa [#allocation3], 1
    %143 = vsyncpa [#allocation6], 1
    %144 = vsyncpa [#allocation4], 1

</llo_original>
